<compile_context>
chip_gen: v5e
topology: v5e:2x2
jax: 0.10.0
libtpu: 0.0.40
codegen_flags: <defaults>
</compile_context>

<pallas_src>
import numpy as np

import jax
import jax.numpy as jnp
from jax import lax
from jax.experimental import pallas as pl
from jax.experimental.pallas import tpu as pltpu

# sim_config / module constants
EPS = 1e-6
MIN_DT = 0.1
MAX_DT = 0.5
COST = [1.0, 1.0, 1.0]          # => x_dim = 3
LAM = 1.0
NULL_VISIT = 10.0
GAMMA = 0.99


def _fb(shape):
    """Full-array BlockSpec for a trivial grid=(1,)."""
    n = len(shape)
    return pl.BlockSpec(shape, lambda i, _n=n: (0,) * _n)


# ----------------------------------------------------------------------------
# Single fused kernel: r_y + cost/mask + losses
# ----------------------------------------------------------------------------
def sensing_forward_pallas(obs_t, eval_t, pred_y, eval_y, obs_m,
                           batch_t, data_mask, value, log_p):
    B, L = obs_t.shape
    E = eval_t.shape[0]
    T = batch_t.shape[1]
    X = obs_m.shape[2]

    # simulate() builds eval_t with exactly `length` (=L) points, so E == L.
    assert E == L, "input packing assumes eval grid length == rollout length"

    C = max(L, T)

    def padw(a):
        a = a.astype(jnp.float32)
        if a.shape[1] < C:
            a = jnp.pad(a, ((0, 0), (0, C - a.shape[1])))
        return a

    # ---- pack ALL tiny 2-D operands into ONE (R, C) array (one DMA) --------
    # rows: [obs_t (B) | value (B) | log_p (B) | batch_t (B) | data_mask (B) |
    #        eval_t (1) | obs_m transposed to (X, B, L) flattened (X*B)]
    obs_m_xbl = jnp.transpose(obs_m, (2, 0, 1)).reshape(X * B, L)
    packed = jnp.concatenate([
        padw(obs_t), padw(value), padw(log_p),
        padw(batch_t), padw(data_mask),
        padw(eval_t.reshape(1, E)),
        padw(obs_m_xbl),
    ], axis=0)                                               # (5B+1+X*B, C)

    R0_BT, R0_DM, R_EVT, R0_OM = 3 * B, 4 * B, 5 * B, 5 * B + 1

    # pred_y / eval_y pre-transposed in the wrapper (lane-dense JS) and packed
    py_ey = jnp.concatenate([jnp.transpose(pred_y, (0, 2, 1)),
                             jnp.transpose(eval_y, (0, 2, 1))],
                            axis=0).astype(jnp.float32)      # (2B, Y, L)

    # trace-time discount matrix W[k, j] = gamma^(k-j) for k >= j (static L)
    kk = np.arange(L)[:, None]
    jj = np.arange(L)[None, :]
    disc = jnp.asarray(
        np.where(kk >= jj, GAMMA ** (kk - jj), 0.0).astype(np.float32))

    # eval_t scale as an SMEM scalar (no in-kernel lane extraction)
    scale = ((eval_t[E - 1] - eval_t[0]) / float(E)).astype(jnp.float32)
    scale = scale.reshape(1)

    R_OUT = max(8, ((3 * B + 1 + 7) // 8) * 8)
    C_OUT = max(128, ((L + 127) // 128) * 128)

    def kernel(scale_ref, packed_ref, py_ey_ref, disc_ref, out_ref):
        scale_s = scale_ref[0]

        obs_t_k = packed_ref[0:B, 0:L]                        # (B, L)
        value_k = packed_ref[B:2 * B, 0:L]                    # (B, L)
        logp_k = packed_ref[2 * B:3 * B, 0:L]                 # (B, L)

        # ------------- r_y: searchsorted one-hot + gathered JS --------------
        # E sits on lanes throughout this block.
        ev = packed_ref[R_EVT:R_EVT + 1, 0:L].reshape(1, 1, L)
        obs_col = obs_t_k.reshape(B, L, 1)
        # torch.searchsorted(obs_t[b], eval_t, side='right') == #{l: obs<=eval}
        cmp = (obs_col <= ev).astype(jnp.int32)               # (B, L, E)
        idx = jnp.sum(cmp, axis=1, keepdims=True)             # (B, 1, E) int32
        l_iota = lax.broadcasted_iota(jnp.int32, (B, L, L), 1)
        sel = (idx == l_iota + 1).astype(jnp.float32)         # (B, L, E) 1-hot

        pred_y_t = py_ey_ref[0:B, :, :]                       # (B, Y, L)
        p = py_ey_ref[B:2 * B, :, :]                          # (B, Y, E)
        # exact gather of the matched prediction via MXU matmul
        q = jnp.einsum('byl,ble->bye', pred_y_t, sel,
                       preferred_element_type=jnp.float32)    # (B, Y, E)

        # fused single-reduction Jensen-Shannon divergence
        m = 0.5 * (p + q)
        log_m = jnp.log(m + EPS)                              # shared (CSE'd)
        log_1m = jnp.log(1.0 - m + EPS)
        integrand = (p * (jnp.log(p + EPS) - log_m)
                     + (1.0 - p) * (jnp.log(1.0 - p + EPS) - log_1m)
                     + q * (jnp.log(q + EPS) - log_m)
                     + (1.0 - q) * (jnp.log(1.0 - q + EPS) - log_1m))
        d_row = 0.5 * jnp.sum(integrand, axis=1, keepdims=True)   # (B, 1, E)

        # scatter back to prediction buckets on the MXU (rows with idx==0
        # have an all-zero sel column and contribute nothing)
        r_y = jnp.einsum('bxe,ble->bxl', d_row, sel,
                         preferred_element_type=jnp.float32)
        r_y = r_y.reshape(B, L) * scale_s                     # (B, L)

        # ------------- cost + mask (no cross-lane reduces) -------------------
        r_m = jnp.zeros((B, L), jnp.float32)
        abs_acc = jnp.zeros((B, L), jnp.float32)
        for x in range(X):                                    # X static (=3)
            om_x = packed_ref[R0_OM + x * B:R0_OM + (x + 1) * B, 0:L]
            r_m = r_m + float(COST[x]) * om_x
            abs_acc = abs_acc + jnp.abs(om_x)
        r_null = (abs_acc == 0.0).astype(jnp.float32)

        bt = packed_ref[R0_BT:R0_BT + B, 0:T]                 # (B, T)
        dm = packed_ref[R0_DM:R0_DM + B, 0:T]                 # (B, T)
        jidx = lax.broadcasted_iota(jnp.int32, (B, T), 1)
        jstar = jnp.max(jnp.where(dm > 0, jidx, -1), axis=1, keepdims=True)
        jstar = jnp.where(jstar < 0, T - 1, jstar)            # last_nonzero
        t_e = jnp.sum(jnp.where(jidx == jstar, bt, 0.0), axis=1, keepdims=True)
        t_s = bt[:, 0:1]

        mask = jnp.logical_and(obs_t_k >= t_s, obs_t_k <= t_e)
        mf = mask.astype(jnp.float32)
        cost = jnp.where(mask, r_m + LAM * r_y + NULL_VISIT * r_null, 0.0)

        # ------------- losses -------------------------------------------------
        # reward[j] = cost[j] + gamma*reward[j+1]  == cost @ disc (suffix sum)
        reward = jnp.dot(cost, disc_ref[...],
                         preferred_element_type=jnp.float32)  # (B, L)

        # fused reduction pass A: cnt and sum(reward*mf)
        rowsA = jnp.sum(jnp.concatenate([mf, reward * mf], axis=0),
                        axis=1, keepdims=True)                # (2B, 1)
        cnt = jnp.sum(rowsA[0:B, :])
        mean = jnp.sum(rowsA[B:2 * B, :]) / cnt

        # pass B: variance (depends on mean) -> unbiased std, normalize
        var = jnp.sum(jnp.square(reward - mean) * mf) / (cnt - 1.0)
        reward_n = (reward - mean) / (jnp.sqrt(var) + EPS)

        # fused reduction pass C: actor & critic sums
        adv = reward_n - value_k
        actor_t = logp_k * adv * mf
        actor_t = jnp.where(jnp.isfinite(actor_t), actor_t, 0.0)  # nan_to_num
        critic_t = jnp.square(value_k - reward_n) * mf
        rowsC = jnp.sum(jnp.concatenate([actor_t, critic_t], axis=0),
                        axis=1, keepdims=True)                # (2B, 1)
        inv_bl = 1.0 / float(B * L)
        actor_loss = jnp.sum(rowsC[0:B, :]) * inv_bl
        critic_loss = jnp.sum(rowsC[B:2 * B, :]) * inv_bl

        # ------------- output slab: zero once, masked sub-slice stores ------
        # rows [0,B): r_y | [B,2B): cost | [2B,3B): mask | row 3B: (actor, critic)
        out_ref[...] = jnp.zeros_like(out_ref)
        out_ref[0:B, 0:L] = r_y
        out_ref[B:2 * B, 0:L] = cost
        out_ref[2 * B:3 * B, 0:L] = mf
        lane = lax.broadcasted_iota(jnp.int32, (1, C_OUT), 1)
        out_ref[3 * B:3 * B + 1, :] = jnp.where(
            lane == 0, actor_loss, jnp.where(lane == 1, critic_loss, 0.0))

    out = pl.pallas_call(
        kernel,
        out_shape=jax.ShapeDtypeStruct((R_OUT, C_OUT), jnp.float32),
        grid=(1,),
        in_specs=[pl.BlockSpec(memory_space=pltpu.MemorySpace.SMEM),  # scale
                  _fb(packed.shape), _fb(py_ey.shape), _fb(disc.shape)],
        out_specs=_fb((R_OUT, C_OUT)),
        compiler_params=pltpu.CompilerParams(
            dimension_semantics=("arbitrary",)),
    )(scale, packed, py_ey, disc)

    r_y_o = out[:B, :L]
    cost_o = out[B:2 * B, :L]
    mask_o = out[2 * B:3 * B, :L]
    actor_loss = out[3 * B, 0]
    critic_loss = out[3 * B, 1]
    return r_y_o, cost_o, mask_o, actor_loss, critic_loss


# ----------------------------------------------------------------------------
# Plain-JAX reference (same semantics, used only to verify the kernel)
# ----------------------------------------------------------------------------
def reference(obs_t, eval_t, pred_y, eval_y, obs_m, batch_t, data_mask,
              value, log_p, cost_vec):
    B, L = obs_t.shape
    E = eval_t.shape[0]

    def plogp_q(p, q):
        return p * (jnp.log(p + EPS) - jnp.log(q + EPS))

    def d_kl(p, q):
        return jnp.sum(plogp_q(p, q), -1) + jnp.sum(plogp_q(1 - p, 1 - q), -1)

    def d_js(p, q):
        m = 0.5 * (p + q)
        return 0.5 * (d_kl(p, m) + d_kl(q, m))

    idx = jnp.sum(obs_t[:, :, None] <= eval_t[None, None, :], axis=1)   # (B, E)
    d = d_js(eval_y[:, :, None, :], pred_y[:, None, :, :])              # (B, E, L)
    sel = idx[:, :, None] == (jnp.arange(L)[None, None, :] + 1)
    r_y = jnp.sum(jnp.where(sel, d, 0.0), axis=1) * (eval_t[-1] - eval_t[0]) / E

    r_m = obs_m @ cost_vec
    r_null = jnp.all(obs_m == 0, axis=-1).astype(jnp.float32)
    T = batch_t.shape[1]
    jidx = jnp.arange(T)[None, :]
    jstar = jnp.max(jnp.where(data_mask > 0, jidx, -1), axis=1)
    jstar = jnp.where(jstar < 0, T - 1, jstar)
    t_e = jnp.take_along_axis(batch_t, jstar[:, None], axis=1)
    t_s = batch_t[:, :1]
    mask = (obs_t >= t_s) & (obs_t <= t_e)
    cost = jnp.where(mask, r_m + LAM * r_y + NULL_VISIT * r_null, 0.0)

    reward = jnp.zeros_like(cost)
    for i in range(1, L + 1):
        last_i = min(L - i + 1, L - 1)
        reward = reward.at[:, L - i].set(cost[:, L - i] + GAMMA * reward[:, last_i])
    mf = mask.astype(jnp.float32)
    cnt = jnp.sum(mf)
    mean = jnp.sum(reward * mf) / cnt
    std = jnp.sqrt(jnp.sum(jnp.square(reward - mean) * mf) / (cnt - 1.0))
    reward = (reward - mean) / (std + EPS)
    adv = reward - value
    actor = jnp.nan_to_num(log_p * adv * mf, nan=0.0, posinf=0.0, neginf=0.0)
    return (r_y, cost, mf,
            jnp.mean(actor), jnp.mean(jnp.square(value - reward) * mf))


# ----------------------------------------------------------------------------
if __name__ == "__main__":
    B, T, X, Y, L = 2, 8, 3, 4, 16   # x_dim=3 (len(cost)), y_dim=4, rollout length 16
    E = L

    key = jax.random.PRNGKey(0)
    k1, k2, k3, k4, k5, k6, k7 = jax.random.split(key, 7)

    batch_t = jnp.cumsum(jax.random.uniform(k1, (B, T), minval=0.1, maxval=0.4),
                         axis=1).astype(jnp.float32)
    data_mask = jnp.ones((B, T), jnp.float32).at[1, -2:].set(0.0)

    t_max = jnp.max(jnp.where(data_mask == 1, batch_t, -jnp.inf))
    t_min = jnp.min(jnp.where(data_mask == 1, batch_t, jnp.inf))

    # synthesized rollout outputs (see TODO(synk) above)
    incr = jax.random.uniform(k2, (B, L - 1), minval=MIN_DT, maxval=MAX_DT)
    obs_body = t_min + jnp.cumsum(incr, axis=1) - incr[:, :1]
    obs_t = jnp.concatenate([jnp.full((B, 1), -1.0), obs_body],
                            axis=1).astype(jnp.float32)
    obs_m = (jax.random.uniform(k3, (B, L, X)) < 0.5).astype(jnp.float32)
    obs_m = obs_m.at[:, 0, :].set(0.0)
    pred_y = jax.nn.sigmoid(jax.random.normal(k4, (B, L, Y))).astype(jnp.float32)
    eval_y = jax.nn.sigmoid(jax.random.normal(k5, (B, E, Y))).astype(jnp.float32)
    value = (0.5 * jax.random.normal(k6, (B, L))).astype(jnp.float32)
    log_p = (-jnp.abs(jax.random.normal(k7, (B, L)))).astype(jnp.float32)

    eval_t = jnp.linspace(t_min, t_max, E).astype(jnp.float32)
    cost_vec = jnp.array(COST, jnp.float32)

    # --- fused Pallas kernel ---
    r_y, cost, mask, actor_loss, critic_loss = sensing_forward_pallas(
        obs_t, eval_t, pred_y, eval_y, obs_m, batch_t, data_mask, value, log_p)
    actor_loss = jax.block_until_ready(actor_loss)

    # --- verify against plain-JAX reference ---
    r_y_ref, cost_ref, mask_ref, actor_ref, critic_ref = reference(
        obs_t, eval_t, pred_y, eval_y, obs_m, batch_t, data_mask,
        value, log_p, cost_vec)

    assert jnp.allclose(r_y, r_y_ref, rtol=1e-4, atol=1e-4)
    assert jnp.allclose(cost, cost_ref, rtol=1e-4, atol=1e-4)
    assert jnp.allclose(mask, mask_ref)
    assert jnp.allclose(actor_loss, actor_ref, rtol=1e-4, atol=1e-4)
    assert jnp.allclose(critic_loss, critic_ref, rtol=1e-4, atol=1e-4)

    print("KERNEL_OK")
</pallas_src>

<mosaic_0001>
module attributes {stable_mosaic.version = 11 : i64} {
  func.func @kernel(%arg0: i32, %arg1: memref<1xf32, #tpu.memory_space<smem>>, %arg2: memref<17x16xf32, #tpu.memory_space<vmem>>, %arg3: memref<4x4x16xf32, #tpu.memory_space<vmem>>, %arg4: memref<16x16xf32, #tpu.memory_space<vmem>>, %arg5: memref<8x128xf32, #tpu.memory_space<vmem>>) attributes {dimension_semantics = [#tpu.dimension_semantics<arbitrary>], iteration_bounds = array<i64: 1>, scalar_prefetch = 0 : i64, scratch_operands = 0 : i64, tpu.core_type = #tpu.core_type<tc>, window_params = [{transform_indices = @transform_0, window_bounds = array<i64: 1>}, {pipeline_mode = #tpu.pipeline_mode<synchronous>, transform_indices = @transform_1, window_bounds = array<i64: 17, 16>}, {pipeline_mode = #tpu.pipeline_mode<synchronous>, transform_indices = @transform_2, window_bounds = array<i64: 4, 4, 16>}, {pipeline_mode = #tpu.pipeline_mode<synchronous>, transform_indices = @transform_3, window_bounds = array<i64: 16, 16>}, {pipeline_mode = #tpu.pipeline_mode<synchronous>, transform_indices = @transform_4, window_bounds = array<i64: 8, 128>}]} {
    %c0 = arith.constant 0 : index
    %0 = memref.load %arg1[%c0] : memref<1xf32, #tpu.memory_space<smem>>
    %c0_0 = arith.constant 0 : index
    %c0_1 = arith.constant 0 : index
    %1 = vector.load %arg2[%c0_0, %c0_1] : memref<17x16xf32, #tpu.memory_space<vmem>>, vector<2x16xf32>
    %c2 = arith.constant 2 : index
    %c0_2 = arith.constant 0 : index
    %2 = vector.load %arg2[%c2, %c0_2] : memref<17x16xf32, #tpu.memory_space<vmem>>, vector<2x16xf32>
    %c4 = arith.constant 4 : index
    %c0_3 = arith.constant 0 : index
    %3 = vector.load %arg2[%c4, %c0_3] : memref<17x16xf32, #tpu.memory_space<vmem>>, vector<2x16xf32>
    %c10 = arith.constant 10 : index
    %c0_4 = arith.constant 0 : index
    %4 = vector.load %arg2[%c10, %c0_4] : memref<17x16xf32, #tpu.memory_space<vmem>>, vector<1x16xf32>
    %5 = vector.shape_cast %4 : vector<1x16xf32> to vector<1x1x16xf32>
    %6 = vector.shape_cast %1 : vector<2x16xf32> to vector<2x16x1xf32>
    %7 = vector.broadcast %6 : vector<2x16x1xf32> to vector<2x16x16xf32>
    %8 = vector.broadcast %5 : vector<1x1x16xf32> to vector<2x16x16xf32>
    %9 = arith.cmpf ole, %7, %8 : vector<2x16x16xf32>
    %10 = arith.extui %9 : vector<2x16x16xi1> to vector<2x16x16xi32>
    %cst = arith.constant dense<0> : vector<2x16xi32>
    %11 = vector.multi_reduction <add>, %10, %cst [1] : vector<2x16x16xi32> to vector<2x16xi32>
    %12 = vector.shape_cast %11 : vector<2x16xi32> to vector<2x1x16xi32>
    %13 = tpu.iota {dimensions = array<i32: 1>} : vector<2x16x16xi32>
    %c1_i32 = arith.constant 1 : i32
    %14 = vector.broadcast %c1_i32 : i32 to vector<2x16x16xi32>
    %15 = arith.addi %13, %14 : vector<2x16x16xi32>
    %16 = vector.broadcast %12 : vector<2x1x16xi32> to vector<2x16x16xi32>
    %17 = arith.cmpi eq, %16, %15 : vector<2x16x16xi32>
    %18 = arith.extui %17 : vector<2x16x16xi1> to vector<2x16x16xi32>
    %19 = arith.sitofp %18 : vector<2x16x16xi32> to vector<2x16x16xf32>
    %c0_5 = arith.constant 0 : index
    %c0_6 = arith.constant 0 : index
    %c0_7 = arith.constant 0 : index
    %20 = vector.load %arg3[%c0_5, %c0_6, %c0_7] : memref<4x4x16xf32, #tpu.memory_space<vmem>>, vector<2x4x16xf32>
    %c2_8 = arith.constant 2 : index
    %c0_9 = arith.constant 0 : index
    %c0_10 = arith.constant 0 : index
    %21 = vector.load %arg3[%c2_8, %c0_9, %c0_10] : memref<4x4x16xf32, #tpu.memory_space<vmem>>, vector<2x4x16xf32>
    "tpu.trace_start"() <{level = 10 : i32, message = "byl,ble->bye"}> : () -> ()
    %cst_11 = arith.constant dense<0.000000e+00> : vector<2x4x16xf32>
    %22 = tpu.matmul %20, %19, %cst_11 {dimension_numbers = #tpu.dot_dimension_numbers<[2], [1], [1], [2], [0, 0, 0, 1, 1, 2], [0], [0]>} : vector<2x4x16xf32>, vector<2x16x16xf32>, vector<2x4x16xf32> -> vector<2x4x16xf32>
    "tpu.trace_stop"() : () -> ()
    %23 = arith.addf %21, %22 : vector<2x4x16xf32>
    %cst_12 = arith.constant 5.000000e-01 : f32
    %24 = vector.broadcast %cst_12 : f32 to vector<2x4x16xf32>
    %25 = arith.mulf %24, %23 : vector<2x4x16xf32>
    %cst_13 = arith.constant 9.99999997E-7 : f32
    %26 = vector.broadcast %cst_13 : f32 to vector<2x4x16xf32>
    %27 = arith.addf %25, %26 : vector<2x4x16xf32>
    %28 = math.log %27 : vector<2x4x16xf32>
    %cst_14 = arith.constant 1.000000e+00 : f32
    %29 = vector.broadcast %cst_14 : f32 to vector<2x4x16xf32>
    %30 = arith.subf %29, %25 : vector<2x4x16xf32>
    %cst_15 = arith.constant 9.99999997E-7 : f32
    %31 = vector.broadcast %cst_15 : f32 to vector<2x4x16xf32>
    %32 = arith.addf %30, %31 : vector<2x4x16xf32>
    %33 = math.log %32 : vector<2x4x16xf32>
    %cst_16 = arith.constant 9.99999997E-7 : f32
    %34 = vector.broadcast %cst_16 : f32 to vector<2x4x16xf32>
    %35 = arith.addf %21, %34 : vector<2x4x16xf32>
    %36 = math.log %35 : vector<2x4x16xf32>
    %37 = arith.subf %36, %28 : vector<2x4x16xf32>
    %38 = arith.mulf %21, %37 : vector<2x4x16xf32>
    %cst_17 = arith.constant 1.000000e+00 : f32
    %39 = vector.broadcast %cst_17 : f32 to vector<2x4x16xf32>
    %40 = arith.subf %39, %21 : vector<2x4x16xf32>
    %cst_18 = arith.constant 1.000000e+00 : f32
    %41 = vector.broadcast %cst_18 : f32 to vector<2x4x16xf32>
    %42 = arith.subf %41, %21 : vector<2x4x16xf32>
    %cst_19 = arith.constant 9.99999997E-7 : f32
    %43 = vector.broadcast %cst_19 : f32 to vector<2x4x16xf32>
    %44 = arith.addf %42, %43 : vector<2x4x16xf32>
    %45 = math.log %44 : vector<2x4x16xf32>
    %46 = arith.subf %45, %33 : vector<2x4x16xf32>
    %47 = arith.mulf %40, %46 : vector<2x4x16xf32>
    %48 = arith.addf %38, %47 : vector<2x4x16xf32>
    %cst_20 = arith.constant 9.99999997E-7 : f32
    %49 = vector.broadcast %cst_20 : f32 to vector<2x4x16xf32>
    %50 = arith.addf %22, %49 : vector<2x4x16xf32>
    %51 = math.log %50 : vector<2x4x16xf32>
    %52 = arith.subf %51, %28 : vector<2x4x16xf32>
    %53 = arith.mulf %22, %52 : vector<2x4x16xf32>
    %54 = arith.addf %48, %53 : vector<2x4x16xf32>
    %cst_21 = arith.constant 1.000000e+00 : f32
    %55 = vector.broadcast %cst_21 : f32 to vector<2x4x16xf32>
    %56 = arith.subf %55, %22 : vector<2x4x16xf32>
    %cst_22 = arith.constant 1.000000e+00 : f32
    %57 = vector.broadcast %cst_22 : f32 to vector<2x4x16xf32>
    %58 = arith.subf %57, %22 : vector<2x4x16xf32>
    %cst_23 = arith.constant 9.99999997E-7 : f32
    %59 = vector.broadcast %cst_23 : f32 to vector<2x4x16xf32>
    %60 = arith.addf %58, %59 : vector<2x4x16xf32>
    %61 = math.log %60 : vector<2x4x16xf32>
    %62 = arith.subf %61, %33 : vector<2x4x16xf32>
    %63 = arith.mulf %56, %62 : vector<2x4x16xf32>
    %64 = arith.addf %54, %63 : vector<2x4x16xf32>
    %cst_24 = arith.constant dense<0.000000e+00> : vector<2x16xf32>
    %65 = vector.multi_reduction <add>, %64, %cst_24 [1] : vector<2x4x16xf32> to vector<2x16xf32>
    %66 = vector.shape_cast %65 : vector<2x16xf32> to vector<2x1x16xf32>
    %cst_25 = arith.constant 5.000000e-01 : f32
    %67 = vector.broadcast %cst_25 : f32 to vector<2x1x16xf32>
    %68 = arith.mulf %67, %66 : vector<2x1x16xf32>
    "tpu.trace_start"() <{level = 10 : i32, message = "bxe,ble->bxl"}> : () -> ()
    %cst_26 = arith.constant dense<0.000000e+00> : vector<2x1x16xf32>
    %69 = tpu.matmul %68, %19, %cst_26 {dimension_numbers = #tpu.dot_dimension_numbers<[2], [2], [1], [1], [0, 0, 0, 1, 1, 1], [0], [0]>} : vector<2x1x16xf32>, vector<2x16x16xf32>, vector<2x1x16xf32> -> vector<2x1x16xf32>
    "tpu.trace_stop"() : () -> ()
    %70 = vector.shape_cast %69 : vector<2x1x16xf32> to vector<2x16xf32>
    %71 = vector.broadcast %0 : f32 to vector<2x16xf32>
    %72 = arith.mulf %70, %71 : vector<2x16xf32>
    %cst_27 = arith.constant 0.000000e+00 : f32
    %73 = vector.broadcast %cst_27 : f32 to vector<2x16xf32>
    %cst_28 = arith.constant 0.000000e+00 : f32
    %74 = vector.broadcast %cst_28 : f32 to vector<2x16xf32>
    %c11 = arith.constant 11 : index
    %c0_29 = arith.constant 0 : index
    %75 = vector.load %arg2[%c11, %c0_29] : memref<17x16xf32, #tpu.memory_space<vmem>>, vector<2x16xf32>
    %cst_30 = arith.constant 1.000000e+00 : f32
    %76 = vector.broadcast %cst_30 : f32 to vector<2x16xf32>
    %77 = arith.mulf %76, %75 : vector<2x16xf32>
    %78 = arith.addf %73, %77 : vector<2x16xf32>
    %79 = math.absf %75 : vector<2x16xf32>
    %80 = arith.addf %74, %79 : vector<2x16xf32>
    %c13 = arith.constant 13 : index
    %c0_31 = arith.constant 0 : index
    %81 = vector.load %arg2[%c13, %c0_31] : memref<17x16xf32, #tpu.memory_space<vmem>>, vector<2x16xf32>
    %cst_32 = arith.constant 1.000000e+00 : f32
    %82 = vector.broadcast %cst_32 : f32 to vector<2x16xf32>
    %83 = arith.mulf %82, %81 : vector<2x16xf32>
    %84 = arith.addf %78, %83 : vector<2x16xf32>
    %85 = math.absf %81 : vector<2x16xf32>
    %86 = arith.addf %80, %85 : vector<2x16xf32>
    %c15 = arith.constant 15 : index
    %c0_33 = arith.constant 0 : index
    %87 = vector.load %arg2[%c15, %c0_33] : memref<17x16xf32, #tpu.memory_space<vmem>>, vector<2x16xf32>
    %cst_34 = arith.constant 1.000000e+00 : f32
    %88 = vector.broadcast %cst_34 : f32 to vector<2x16xf32>
    %89 = arith.mulf %88, %87 : vector<2x16xf32>
    %90 = arith.addf %84, %89 : vector<2x16xf32>
    %91 = math.absf %87 : vector<2x16xf32>
    %92 = arith.addf %86, %91 : vector<2x16xf32>
    %cst_35 = arith.constant 0.000000e+00 : f32
    %93 = vector.broadcast %cst_35 : f32 to vector<2x16xf32>
    %94 = arith.cmpf oeq, %92, %93 : vector<2x16xf32>
    %95 = arith.extui %94 : vector<2x16xi1> to vector<2x16xi32>
    %96 = arith.sitofp %95 : vector<2x16xi32> to vector<2x16xf32>
    %c6 = arith.constant 6 : index
    %c0_36 = arith.constant 0 : index
    %97 = vector.load %arg2[%c6, %c0_36] : memref<17x16xf32, #tpu.memory_space<vmem>>, vector<2x8xf32>
    %c8 = arith.constant 8 : index
    %c0_37 = arith.constant 0 : index
    %98 = vector.load %arg2[%c8, %c0_37] : memref<17x16xf32, #tpu.memory_space<vmem>>, vector<2x8xf32>
    %99 = tpu.iota {dimensions = array<i32: 1>} : vector<2x8xi32>
    %cst_38 = arith.constant 0.000000e+00 : f32
    %100 = vector.broadcast %cst_38 : f32 to vector<2x8xf32>
    %101 = arith.cmpf ogt, %98, %100 : vector<2x8xf32>
    %c-1_i32 = arith.constant -1 : i32
    %102 = vector.broadcast %c-1_i32 : i32 to vector<2x8xi32>
    %103 = arith.select %101, %99, %102 : vector<2x8xi1>, vector<2x8xi32>
    %cst_39 = arith.constant dense<-2147483648> : vector<2xi32>
    %104 = vector.multi_reduction <maxsi>, %103, %cst_39 [1] : vector<2x8xi32> to vector<2xi32>
    %105 = vector.shape_cast %104 : vector<2xi32> to vector<2x1xi32>
    %c0_i32 = arith.constant 0 : i32
    %106 = vector.broadcast %c0_i32 : i32 to vector<2x1xi32>
    %107 = arith.cmpi slt, %105, %106 : vector<2x1xi32>
    %c7_i32 = arith.constant 7 : i32
    %108 = vector.broadcast %c7_i32 : i32 to vector<2x1xi32>
    %109 = arith.select %107, %108, %105 : vector<2x1xi1>, vector<2x1xi32>
    %110 = vector.broadcast %109 : vector<2x1xi32> to vector<2x8xi32>
    %111 = arith.cmpi eq, %99, %110 : vector<2x8xi32>
    %cst_40 = arith.constant 0.000000e+00 : f32
    %112 = vector.broadcast %cst_40 : f32 to vector<2x8xf32>
    %113 = arith.select %111, %97, %112 : vector<2x8xi1>, vector<2x8xf32>
    %cst_41 = arith.constant dense<0.000000e+00> : vector<2xf32>
    %114 = vector.multi_reduction <add>, %113, %cst_41 [1] : vector<2x8xf32> to vector<2xf32>
    %115 = vector.shape_cast %114 : vector<2xf32> to vector<2x1xf32>
    %116 = vector.extract_strided_slice %97 {offsets = [0, 0], sizes = [2, 1], strides = [1, 1]} : vector<2x8xf32> to vector<2x1xf32>
    %117 = vector.broadcast %116 : vector<2x1xf32> to vector<2x16xf32>
    %118 = arith.cmpf oge, %1, %117 : vector<2x16xf32>
    %119 = vector.broadcast %115 : vector<2x1xf32> to vector<2x16xf32>
    %120 = arith.cmpf ole, %1, %119 : vector<2x16xf32>
    %121 = arith.andi %118, %120 : vector<2x16xi1>
    %122 = arith.extui %121 : vector<2x16xi1> to vector<2x16xi32>
    %123 = arith.sitofp %122 : vector<2x16xi32> to vector<2x16xf32>
    %cst_42 = arith.constant 1.000000e+00 : f32
    %124 = vector.broadcast %cst_42 : f32 to vector<2x16xf32>
    %125 = arith.mulf %124, %72 : vector<2x16xf32>
    %126 = arith.addf %90, %125 : vector<2x16xf32>
    %cst_43 = arith.constant 1.000000e+01 : f32
    %127 = vector.broadcast %cst_43 : f32 to vector<2x16xf32>
    %128 = arith.mulf %127, %96 : vector<2x16xf32>
    %129 = arith.addf %126, %128 : vector<2x16xf32>
    %cst_44 = arith.constant 0.000000e+00 : f32
    %130 = vector.broadcast %cst_44 : f32 to vector<2x16xf32>
    %131 = arith.select %121, %129, %130 : vector<2x16xi1>, vector<2x16xf32>
    %c0_45 = arith.constant 0 : index
    %c0_46 = arith.constant 0 : index
    %132 = vector.load %arg4[%c0_45, %c0_46] : memref<16x16xf32, #tpu.memory_space<vmem>>, vector<16x16xf32>
    %cst_47 = arith.constant dense<0.000000e+00> : vector<2x16xf32>
    %133 = tpu.matmul %131, %132, %cst_47 {dimension_numbers = #tpu.dot_dimension_numbers<[1], [0], [0], [1], [0, 0, 1, 1], [], []>} : vector<2x16xf32>, vector<16x16xf32>, vector<2x16xf32> -> vector<2x16xf32>
    %134 = arith.mulf %133, %123 : vector<2x16xf32>
    %135 = tpu.concatenate %123, %134 in 0 : vector<2x16xf32>, vector<2x16xf32> -> vector<4x16xf32>
    %cst_48 = arith.constant dense<0.000000e+00> : vector<4xf32>
    %136 = vector.multi_reduction <add>, %135, %cst_48 [1] : vector<4x16xf32> to vector<4xf32>
    %137 = vector.shape_cast %136 : vector<4xf32> to vector<4x1xf32>
    %138 = vector.extract_strided_slice %137 {offsets = [0, 0], sizes = [2, 1], strides = [1, 1]} : vector<4x1xf32> to vector<2x1xf32>
    %139 = vector.shape_cast %138 : vector<2x1xf32> to vector<1x2x1xf32>
    %cst_49 = arith.constant dense<0.000000e+00> : vector<1xf32>
    %140 = vector.multi_reduction <add>, %139, %cst_49 [1, 2] : vector<1x2x1xf32> to vector<1xf32>
    %141 = vector.shape_cast %140 : vector<1xf32> to vector<1x1x1xf32>
    %142 = vector.extract %141[0, 0, 0] : f32 from vector<1x1x1xf32>
    %143 = vector.extract_strided_slice %137 {offsets = [2, 0], sizes = [2, 1], strides = [1, 1]} : vector<4x1xf32> to vector<2x1xf32>
    %144 = vector.shape_cast %143 : vector<2x1xf32> to vector<1x2x1xf32>
    %cst_50 = arith.constant dense<0.000000e+00> : vector<1xf32>
    %145 = vector.multi_reduction <add>, %144, %cst_50 [1, 2] : vector<1x2x1xf32> to vector<1xf32>
    %146 = vector.shape_cast %145 : vector<1xf32> to vector<1x1x1xf32>
    %147 = vector.extract %146[0, 0, 0] : f32 from vector<1x1x1xf32>
    %148 = arith.divf %147, %142 : f32
    %149 = vector.broadcast %148 : f32 to vector<2x16xf32>
    %150 = arith.subf %133, %149 : vector<2x16xf32>
    %151 = arith.mulf %150, %150 : vector<2x16xf32>
    %152 = arith.mulf %151, %123 : vector<2x16xf32>
    %153 = vector.shape_cast %152 : vector<2x16xf32> to vector<1x2x16xf32>
    %cst_51 = arith.constant dense<0.000000e+00> : vector<1xf32>
    %154 = vector.multi_reduction <add>, %153, %cst_51 [1, 2] : vector<1x2x16xf32> to vector<1xf32>
    %155 = vector.shape_cast %154 : vector<1xf32> to vector<1x1x1xf32>
    %156 = vector.extract %155[0, 0, 0] : f32 from vector<1x1x1xf32>
    %cst_52 = arith.constant 1.000000e+00 : f32
    %157 = arith.subf %142, %cst_52 : f32
    %158 = arith.divf %156, %157 : f32
    %159 = vector.broadcast %148 : f32 to vector<2x16xf32>
    %160 = arith.subf %133, %159 : vector<2x16xf32>
    %161 = math.sqrt %158 : f32
    %cst_53 = arith.constant 9.99999997E-7 : f32
    %162 = arith.addf %161, %cst_53 : f32
    %163 = vector.broadcast %162 : f32 to vector<2x16xf32>
    %164 = arith.divf %160, %163 : vector<2x16xf32>
    %165 = arith.subf %164, %2 : vector<2x16xf32>
    %166 = arith.mulf %3, %165 : vector<2x16xf32>
    %167 = arith.mulf %166, %123 : vector<2x16xf32>
    %168 = tpu.weird %167 : vector<2x16xf32> -> vector<2x16xi1>
    %cst_54 = arith.constant dense<true> : vector<2x16xi1>
    %169 = arith.xori %168, %cst_54 : vector<2x16xi1>
    %cst_55 = arith.constant 0.000000e+00 : f32
    %170 = vector.broadcast %cst_55 : f32 to vector<2x16xf32>
    %171 = arith.select %169, %167, %170 : vector<2x16xi1>, vector<2x16xf32>
    %172 = arith.subf %2, %164 : vector<2x16xf32>
    %173 = arith.mulf %172, %172 : vector<2x16xf32>
    %174 = arith.mulf %173, %123 : vector<2x16xf32>
    %175 = tpu.concatenate %171, %174 in 0 : vector<2x16xf32>, vector<2x16xf32> -> vector<4x16xf32>
    %cst_56 = arith.constant dense<0.000000e+00> : vector<4xf32>
    %176 = vector.multi_reduction <add>, %175, %cst_56 [1] : vector<4x16xf32> to vector<4xf32>
    %177 = vector.shape_cast %176 : vector<4xf32> to vector<4x1xf32>
    %178 = vector.extract_strided_slice %177 {offsets = [0, 0], sizes = [2, 1], strides = [1, 1]} : vector<4x1xf32> to vector<2x1xf32>
    %179 = vector.shape_cast %178 : vector<2x1xf32> to vector<1x2x1xf32>
    %cst_57 = arith.constant dense<0.000000e+00> : vector<1xf32>
    %180 = vector.multi_reduction <add>, %179, %cst_57 [1, 2] : vector<1x2x1xf32> to vector<1xf32>
    %181 = vector.shape_cast %180 : vector<1xf32> to vector<1x1x1xf32>
    %182 = vector.extract %181[0, 0, 0] : f32 from vector<1x1x1xf32>
    %cst_58 = arith.constant 3.125000e-02 : f32
    %183 = arith.mulf %182, %cst_58 : f32
    %184 = vector.extract_strided_slice %177 {offsets = [2, 0], sizes = [2, 1], strides = [1, 1]} : vector<4x1xf32> to vector<2x1xf32>
    %185 = vector.shape_cast %184 : vector<2x1xf32> to vector<1x2x1xf32>
    %cst_59 = arith.constant dense<0.000000e+00> : vector<1xf32>
    %186 = vector.multi_reduction <add>, %185, %cst_59 [1, 2] : vector<1x2x1xf32> to vector<1xf32>
    %187 = vector.shape_cast %186 : vector<1xf32> to vector<1x1x1xf32>
    %188 = vector.extract %187[0, 0, 0] : f32 from vector<1x1x1xf32>
    %cst_60 = arith.constant 3.125000e-02 : f32
    %189 = arith.mulf %188, %cst_60 : f32
    %cst_61 = arith.constant 0.000000e+00 : f32
    %190 = vector.broadcast %cst_61 : f32 to vector<8x128xf32>
    %c0_62 = arith.constant 0 : index
    %c0_63 = arith.constant 0 : index
    %191 = vector.load %arg5[%c0_62, %c0_63] : memref<8x128xf32, #tpu.memory_space<vmem>>, vector<8x128xf32>
    tpu.vector_store %arg5[%c0_62, %c0_63], %190 {strides = array<i32>} : memref<8x128xf32, #tpu.memory_space<vmem>>, vector<8x128xf32>,
    %c0_64 = arith.constant 0 : index
    %c0_65 = arith.constant 0 : index
    %192 = vector.load %arg5[%c0_64, %c0_65] : memref<8x128xf32, #tpu.memory_space<vmem>>, vector<2x16xf32>
    tpu.vector_store %arg5[%c0_64, %c0_65], %72 {strides = array<i32>} : memref<8x128xf32, #tpu.memory_space<vmem>>, vector<2x16xf32>,
    %c2_66 = arith.constant 2 : index
    %c0_67 = arith.constant 0 : index
    %193 = vector.load %arg5[%c2_66, %c0_67] : memref<8x128xf32, #tpu.memory_space<vmem>>, vector<2x16xf32>
    tpu.vector_store %arg5[%c2_66, %c0_67], %131 {strides = array<i32>} : memref<8x128xf32, #tpu.memory_space<vmem>>, vector<2x16xf32>,
    %c4_68 = arith.constant 4 : index
    %c0_69 = arith.constant 0 : index
    %194 = vector.load %arg5[%c4_68, %c0_69] : memref<8x128xf32, #tpu.memory_space<vmem>>, vector<2x16xf32>
    tpu.vector_store %arg5[%c4_68, %c0_69], %123 {strides = array<i32>} : memref<8x128xf32, #tpu.memory_space<vmem>>, vector<2x16xf32>,
    %195 = tpu.iota {dimensions = array<i32: 1>} : vector<1x128xi32>
    %c0_i32_70 = arith.constant 0 : i32
    %196 = vector.broadcast %c0_i32_70 : i32 to vector<1x128xi32>
    %197 = arith.cmpi eq, %195, %196 : vector<1x128xi32>
    %c1_i32_71 = arith.constant 1 : i32
    %198 = vector.broadcast %c1_i32_71 : i32 to vector<1x128xi32>
    %199 = arith.cmpi eq, %195, %198 : vector<1x128xi32>
    %cst_72 = arith.constant 0.000000e+00 : f32
    %200 = vector.broadcast %189 : f32 to vector<1x128xf32>
    %201 = vector.broadcast %cst_72 : f32 to vector<1x128xf32>
    %202 = arith.select %199, %200, %201 : vector<1x128xi1>, vector<1x128xf32>
    %203 = vector.broadcast %183 : f32 to vector<1x128xf32>
    %204 = arith.select %197, %203, %202 : vector<1x128xi1>, vector<1x128xf32>
    %c6_73 = arith.constant 6 : index
    %c0_74 = arith.constant 0 : index
    %205 = vector.load %arg5[%c6_73, %c0_74] : memref<8x128xf32, #tpu.memory_space<vmem>>, vector<1x128xf32>
    tpu.vector_store %arg5[%c6_73, %c0_74], %204 {strides = array<i32>} : memref<8x128xf32, #tpu.memory_space<vmem>>, vector<1x128xf32>,
    return
  }
  func.func @transform_0(%arg0: i32) -> i32 {
    %c0_i32 = arith.constant 0 : i32
    %c0_i32_0 = arith.constant 0 : i32
    return %c0_i32 : i32
  }
  func.func @transform_1(%arg0: i32) -> (i32, i32) {
    %c0_i32 = arith.constant 0 : i32
    %c0_i32_0 = arith.constant 0 : i32
    %c0_i32_1 = arith.constant 0 : i32
    return %c0_i32, %c0_i32_0 : i32, i32
  }
  func.func @transform_2(%arg0: i32) -> (i32, i32, i32) {
    %c0_i32 = arith.constant 0 : i32
    %c0_i32_0 = arith.constant 0 : i32
    %c0_i32_1 = arith.constant 0 : i32
    %c0_i32_2 = arith.constant 0 : i32
    return %c0_i32, %c0_i32_0, %c0_i32_1 : i32, i32, i32
  }
  func.func @transform_3(%arg0: i32) -> (i32, i32) {
    %c0_i32 = arith.constant 0 : i32
    %c0_i32_0 = arith.constant 0 : i32
    %c0_i32_1 = arith.constant 0 : i32
    return %c0_i32, %c0_i32_0 : i32, i32
  }
  func.func @transform_4(%arg0: i32) -> (i32, i32) {
    %c0_i32 = arith.constant 0 : i32
    %c0_i32_0 = arith.constant 0 : i32
    %c0_i32_1 = arith.constant 0 : i32
    return %c0_i32, %c0_i32_0 : i32, i32
  }
}

</mosaic_0001>

<llo_original>
// kernel: tpu_custom_call.1
$region0: #{tpu_custom_call.1}
  #allocation0 [shape = 'u32[]', space=smem, size = 0x4, offset = 0x4, fixed_abs, tag = 'smem constant byte address 0x4 - core index']
  #allocation1 [shape = 'u32[72,128]{1,0:T(1,128)}', space=vmem, size = 0x9000, scoped, tag = 'internal scratch']
  #allocation2 [shape = 'f32[1]{0:T(128)S(6)}', space=smem, size = 0x200, scoped, tag = 'scoped memory for tpu_custom_call.1']
  %s0 = inlined_call_operand.<no memory space> [shape: f32[1], index: 0, kind: input, shape index: {}]
  %s1 = inlined_call_operand.vmem [shape: f32[17,16], index: 1, kind: input, shape index: {}]
  %s2 = inlined_call_operand.vmem [shape: f32[4,4,16], index: 2, kind: input, shape index: {}]
  %s3 = inlined_call_operand.vmem [shape: f32[16,16], index: 3, kind: input, shape index: {}]
  %s4 = inlined_call_operand.hbm [shape: f32[8,128], index: 4, kind: output, shape index: {}]
  %s5 = sld [smem:[#allocation0]]
  $region26: #{tpu_custom_call.1} parent=0
    _
  %s7 = ssub.s32 1, %s5
  %s8 = scalar_select 0, %s7, %s5
  %9 = sst [smem:[#allocation2]] %s0
  $region1: #{tpu_custom_call.1} parent=0
    #allocation3 [shape = 'u8[4096]{0}', space=vmem, size = 0x1000, scoped, tag = 'output window, operand 0, single buffered']
    #allocation4 [shape = 's32[1]{0}', space=sflag, size = 0x4, scoped, tag = 'scoped memory for tpu_custom_call.1']
    %10 = vsyncpa [#allocation4], 0
    // Predicated region
    $region2: #{tpu_custom_call.1} parent=1 // pred_check
      _
    $region3: #{tpu_custom_call.1} parent=1 // pred_check_branch
      %12 = sbr.rel (0) target = $region5
    $region4: #{tpu_custom_call.1} parent=1 // pred_region
      _
    $region5: #{tpu_custom_call.1} parent=1 // pred_fallthru
      _
    // Predicated region
    $region6: #{tpu_custom_call.1} parent=1 // pred_check
      _
    $region7: #{tpu_custom_call.1} parent=1 // pred_check_branch
      %14 = sbr.rel (0) target = $region9
    $region8: #{tpu_custom_call.1} parent=1 // pred_region
      _
    $region9: #{tpu_custom_call.1} parent=1 // pred_fallthru
      _
    // Predicated region
    $region10: #{tpu_custom_call.1} parent=1 // pred_check
      _
    $region11: #{tpu_custom_call.1} parent=1 // pred_check_branch
      %16 = sbr.rel (0) target = $region13
    $region12: #{tpu_custom_call.1} parent=1 // pred_region
      _
    $region13: #{tpu_custom_call.1} parent=1 // pred_fallthru
      _
    // Predicated region
    $region14: #{tpu_custom_call.1} parent=1 // pred_check
      _
    $region15: #{tpu_custom_call.1} parent=1 // pred_check_branch
      %18 = sbr.rel (0) target = $region17
    $region16: #{tpu_custom_call.1} parent=1 // pred_region
      _
    $region17: #{tpu_custom_call.1} parent=1 // pred_fallthru
      _
    %s19 = sld [smem:[#allocation2]]
    %v20 = vld [vmem:[%s1] sm:$0x3]
    %v21 = vld [vmem:[%s1 + $0x2] sm:$0x3]
    %v22 = vld [vmem:[%s1 + $0x4] sm:$0x3]
    %v23 = vld [vmem:[%s1 + $0xa] sm:$0x1]
    %v24 = vperm.slane %v20, 0
    %v25 = vlaneseq
    %v26 = vshrl.u32 %v25, 7
    %28 = vset.pattern.permute.xlu0 %v26
    %29 = vperm.xlu0 %28, %v24
    %v30 = vpop.permute.xlu0 %29
    %v31 = vlaneseq
    %v32 = vshrl.u32 %v31, 7
    %v33 = vadd.s32 %v32, 8
    %34 = vset.pattern.permute.xlu0 %v33
    %35 = vperm.xlu0 %34, %v24
    %v36 = vpop.permute.xlu0 %35
    %v37 = vperm.slane %v20, 1
    %v38 = vlaneseq
    %v39 = vshrl.u32 %v38, 7
    %41 = vset.pattern.permute.xlu0 %v39
    %42 = vperm.xlu0 %41, %v37
    %v43 = vpop.permute.xlu0 %42
    %v44 = vlaneseq
    %v45 = vshrl.u32 %v44, 7
    %v46 = vadd.s32 %v45, 8
    %47 = vset.pattern.permute.xlu0 %v46
    %48 = vperm.xlu0 %47, %v37
    %v49 = vpop.permute.xlu0 %48
    %v50 = vperm.slane %v23, 0
    %vm51 = vcmp.le.f32.partialorder %v30, %v50
    %vm52 = vcmp.le.f32.partialorder %v36, %v50
    %vm53 = vcmp.le.f32.partialorder %v43, %v50
    %vm54 = vcmp.le.f32.partialorder %v49, %v50
    %v55 = vsel %vm51, 1, 0
    %v56 = vsel %vm52, 1, 0
    %v57 = vsel %vm53, 1, 0
    %v58 = vsel %vm54, 1, 0
    %vm59 = vcmask 130048
    %v60 = vsel %vm59, %v55, 0
    %v61 = vsel %vm59, %v56, 0
    %v62 = vadd.s32 %v60, %v61
    %v63 = vrot.slane %v62, 4
    %v64 = vadd.s32 %v62, %v63
    %v65 = vrot.slane %v64, 2
    %v66 = vadd.s32 %v64, %v65
    %v67 = vrot.slane %v66, 1
    %v68 = vadd.s32 %v66, %v67
    %v69 = vsel %vm59, %v57, 0
    %v70 = vsel %vm59, %v58, 0
    %v71 = vadd.s32 %v69, %v70
    %v72 = vrot.slane %v71, 4
    %v73 = vadd.s32 %v71, %v72
    %v74 = vrot.slane %v73, 2
    %v75 = vadd.s32 %v73, %v74
    %v76 = vrot.slane %v75, 1
    %v77 = vadd.s32 %v75, %v76
    %v78 = vlaneseq
    %v79 = vshrl.u32 %v78, 7
    %v80 = vadd.s32 %v79, 8
    %v81 = vadd.s32 %v79, 1
    %v82 = vadd.s32 %v80, 1
    %vm83 = vcmp.eq.s32.totalorder %v68, %v81
    %vm84 = vcmp.eq.s32.totalorder %v68, %v82
    %vm85 = vcmp.eq.s32.totalorder %v77, %v81
    %vm86 = vcmp.eq.s32.totalorder %v77, %v82
    %v87 = vsel %vm83, 1, 0
    %v88 = vsel %vm84, 1, 0
    %v89 = vsel %vm85, 1, 0
    %v90 = vsel %vm86, 1, 0
    %v91 = vcvt.s32.f32 %v87
    %v92 = vcvt.s32.f32 %v88
    %v93 = vcvt.s32.f32 %v89
    %v94 = vcvt.s32.f32 %v90
    %v95 = vld [vmem:[%s2] sm:$0xf]
    %v96 = vld [vmem:[%s2 + $0x4] sm:$0xf]
    %s97 = scalar_lea.vmem %s2, 8
    %v98 = vld [vmem:[%s97] sm:$0xf]
    %v99 = vld [vmem:[%s97 + $0x4] sm:$0xf]
    %v101 = vsel %vm59, %v95, 0
    %103 = vmatpush.msra.mxu0 0.0
    %104 = vmatpush.msra.mxu0 0.0
    %105 = vmatpush.msra.mxu0 0.0
    %106 = vmatpush.msra.mxu0 0.0
    %107 = vmatpush.msra.mxu0 0.0
    %108 = vmatpush.msra.mxu0 0.0
    %109 = vmatpush.msra.mxu0 0.0
    %110 = vmatpush.msra.mxu0 0.0
    %111 = vmatpush.msra.mxu0 0.0
    %112 = vmatpush.msra.mxu0 0.0
    %113 = vmatpush.msra.mxu0 0.0
    %114 = vmatpush.msra.mxu0 0.0
    %115 = vmatpush.msra.mxu0 0.0
    %116 = vmatpush.msra.mxu0 0.0
    %117 = vmatpush.msra.mxu0 %v92
    %118 = vmatpush.msra.mxu0 %v91
    %119 = vmatmul.f32.gmra.mxu0 %v101
    %v120 = vpop.f32.mrf.mxu0
    %v121 = vadd.f32 0.0, %v120
    %122 = vdwg.mxu0
    %v124 = vsel %vm59, %v96, 0
    %126 = vmatpush.msra.mxu0 0.0
    %127 = vmatpush.msra.mxu0 0.0
    %128 = vmatpush.msra.mxu0 0.0
    %129 = vmatpush.msra.mxu0 0.0
    %130 = vmatpush.msra.mxu0 0.0
    %131 = vmatpush.msra.mxu0 0.0
    %132 = vmatpush.msra.mxu0 0.0
    %133 = vmatpush.msra.mxu0 0.0
    %134 = vmatpush.msra.mxu0 0.0
    %135 = vmatpush.msra.mxu0 0.0
    %136 = vmatpush.msra.mxu0 0.0
    %137 = vmatpush.msra.mxu0 0.0
    %138 = vmatpush.msra.mxu0 0.0
    %139 = vmatpush.msra.mxu0 0.0
    %140 = vmatpush.msra.mxu0 %v94
    %141 = vmatpush.msra.mxu0 %v93
    %142 = vmatmul.f32.gmra.mxu0 %v124
    %v143 = vpop.f32.mrf.mxu0
    %v144 = vadd.f32 0.0, %v143
    %145 = vdwg.mxu0
    %v146 = vadd.f32 %v98, %v121
    %v147 = vadd.f32 %v99, %v144
    %v148 = vmul.f32 %v146, 0.5
    %v149 = vmul.f32 %v147, 0.5
    %v150 = vadd.f32 %v148, 1e-06
    %v151 = vadd.f32 %v149, 1e-06
    %v152 = vlog2.pop %v150
    %v153 = vmul.f32 %v152, 0.6931472
    %v154 = vlog2.pop %v151
    %v155 = vmul.f32 %v154, 0.6931472
    %v156 = vsub.f32 1.0, %v148
    %v157 = vsub.f32 1.0, %v149
    %v158 = vadd.f32 %v156, 1e-06
    %v159 = vadd.f32 %v157, 1e-06
    %v160 = vlog2.pop %v158
    %v161 = vmul.f32 %v160, 0.6931472
    %v162 = vlog2.pop %v159
    %v163 = vmul.f32 %v162, 0.6931472
    %v164 = vadd.f32 %v98, 1e-06
    %v165 = vadd.f32 %v99, 1e-06
    %v166 = vlog2.pop %v164
    %v167 = vmul.f32 %v166, 0.6931472
    %v168 = vlog2.pop %v165
    %v169 = vmul.f32 %v168, 0.6931472
    %v170 = vsub.f32 %v167, %v153
    %v171 = vsub.f32 %v169, %v155
    %v172 = vmul.f32 %v98, %v170
    %v173 = vmul.f32 %v99, %v171
    %v174 = vsub.f32 1.0, %v98
    %v175 = vsub.f32 1.0, %v99
    %v176 = vadd.f32 %v174, 1e-06
    %v177 = vadd.f32 %v175, 1e-06
    %v178 = vlog2.pop %v176
    %v179 = vmul.f32 %v178, 0.6931472
    %v180 = vlog2.pop %v177
    %v181 = vmul.f32 %v180, 0.6931472
    %v182 = vsub.f32 %v179, %v161
    %v183 = vsub.f32 %v181, %v163
    %v184 = vmul.f32 %v174, %v182
    %v185 = vmul.f32 %v175, %v183
    %v186 = vadd.f32 %v172, %v184
    %v187 = vadd.f32 %v173, %v185
    %v188 = vadd.f32 %v121, 1e-06
    %v189 = vadd.f32 %v144, 1e-06
    %v190 = vlog2.pop %v188
    %v191 = vmul.f32 %v190, 0.6931472
    %v192 = vlog2.pop %v189
    %v193 = vmul.f32 %v192, 0.6931472
    %v194 = vsub.f32 %v191, %v153
    %v195 = vsub.f32 %v193, %v155
    %v196 = vmul.f32 %v121, %v194
    %v197 = vmul.f32 %v144, %v195
    %v198 = vadd.f32 %v186, %v196
    %v199 = vadd.f32 %v187, %v197
    %v200 = vsub.f32 1.0, %v121
    %v201 = vsub.f32 1.0, %v144
    %v202 = vadd.f32 %v200, 1e-06
    %v203 = vadd.f32 %v201, 1e-06
    %v204 = vlog2.pop %v202
    %v205 = vmul.f32 %v204, 0.6931472
    %v206 = vlog2.pop %v203
    %v207 = vmul.f32 %v206, 0.6931472
    %v208 = vsub.f32 %v205, %v161
    %v209 = vsub.f32 %v207, %v163
    %v210 = vmul.f32 %v200, %v208
    %v211 = vmul.f32 %v201, %v209
    %v212 = vadd.f32 %v198, %v210
    %v213 = vadd.f32 %v199, %v211
    %vm214 = vcmask 125952
    %v215 = vsel %vm214, %v212, 0.0
    %v216 = vrot.slane %v215, 4
    %v217 = vadd.f32 %v215, %v216
    %v218 = vrot.slane %v217, 2
    %v219 = vadd.f32 %v217, %v218
    %v220 = vrot.slane %v219, 1
    %v221 = vadd.f32 %v219, %v220
    %v222 = vsel %vm214, %v213, 0.0
    %v223 = vrot.slane %v222, 4
    %v224 = vadd.f32 %v222, %v223
    %v225 = vrot.slane %v224, 2
    %v226 = vadd.f32 %v224, %v225
    %v227 = vrot.slane %v226, 1
    %v228 = vadd.f32 %v226, %v227
    %v229 = vmul.f32 %v221, 0.5
    %v230 = vmul.f32 %v228, 0.5
    %v232 = vsel %vm59, %v229, 0
    %v235 = vsel %vm59, %v91, 0
    %v238 = vsel %vm59, %v92, 0
    %240 = vmatpush.xpose.msra.mxu0 0.0
    %241 = vmatpush.xpose.msra.mxu0 0.0
    %242 = vmatpush.xpose.msra.mxu0 0.0
    %243 = vmatpush.xpose.msra.mxu0 0.0
    %244 = vmatpush.xpose.msra.mxu0 0.0
    %245 = vmatpush.xpose.msra.mxu0 0.0
    %246 = vmatpush.xpose.msra.mxu0 0.0
    %247 = vmatpush.xpose.msra.mxu0 0.0
    %248 = vmatpush.xpose.msra.mxu0 0.0
    %249 = vmatpush.xpose.msra.mxu0 0.0
    %250 = vmatpush.xpose.msra.mxu0 0.0
    %251 = vmatpush.xpose.msra.mxu0 0.0
    %252 = vmatpush.xpose.msra.mxu0 0.0
    %253 = vmatpush.xpose.msra.mxu0 0.0
    %254 = vmatpush.xpose.msra.mxu0 %v238
    %255 = vmatpush.xpose.msra.mxu0 %v235
    %256 = vmatmul.f32.gmra.mxu0 %v232
    %v257 = vpop.f32.mrf.mxu0
    %v258 = vadd.f32 0.0, %v257
    %259 = vdwg.mxu0
    %v261 = vsel %vm59, %v230, 0
    %v264 = vsel %vm59, %v93, 0
    %v267 = vsel %vm59, %v94, 0
    %269 = vmatpush.xpose.msra.mxu0 0.0
    %270 = vmatpush.xpose.msra.mxu0 0.0
    %271 = vmatpush.xpose.msra.mxu0 0.0
    %272 = vmatpush.xpose.msra.mxu0 0.0
    %273 = vmatpush.xpose.msra.mxu0 0.0
    %274 = vmatpush.xpose.msra.mxu0 0.0
    %275 = vmatpush.xpose.msra.mxu0 0.0
    %276 = vmatpush.xpose.msra.mxu0 0.0
    %277 = vmatpush.xpose.msra.mxu0 0.0
    %278 = vmatpush.xpose.msra.mxu0 0.0
    %279 = vmatpush.xpose.msra.mxu0 0.0
    %280 = vmatpush.xpose.msra.mxu0 0.0
    %281 = vmatpush.xpose.msra.mxu0 0.0
    %282 = vmatpush.xpose.msra.mxu0 0.0
    %283 = vmatpush.xpose.msra.mxu0 %v267
    %284 = vmatpush.xpose.msra.mxu0 %v264
    %285 = vmatmul.f32.gmra.mxu0 %v261
    %v286 = vpop.f32.mrf.mxu0
    %v287 = vadd.f32 0.0, %v286
    %288 = vdwg.mxu0
    %v289 = vstv %s19
    %v290 = vmul.f32 %v258, %v289
    %v291 = vmul.f32 %v287, %v289
    %v292 = vld [vmem:[%s1 + $0xb] sm:$0x3]
    %v293 = vadd.f32 %v292, 0.0
    %v294 = vand.u32 2147483647, %v292
    %v295 = vadd.f32 %v294, 0.0
    %v296 = vld [vmem:[%s1 + $0xd] sm:$0x3]
    %v297 = vadd.f32 %v293, %v296
    %v298 = vand.u32 2147483647, %v296
    %v299 = vadd.f32 %v295, %v298
    %v300 = vld [vmem:[%s1 + $0xf] sm:$0x3]
    %v301 = vadd.f32 %v297, %v300
    %v302 = vand.u32 2147483647, %v300
    %v303 = vadd.f32 %v299, %v302
    %vm304 = vcmp.eq.f32.partialorder %v303, 0.0
    %v305 = vsel %vm304, 1, 0
    %v306 = vcvt.s32.f32 %v305
    %v307 = vld [vmem:[%s1 + $0x6] sm:$0x3]
    %v308 = vld [vmem:[%s1 + $0x8] sm:$0x3]
    %v309 = vlaneseq
    %v310 = vand.u32 %v309, 127
    %vm311 = vcmp.gt.f32.partialorder %v308, 0.0
    %v312 = vsel %vm311, %v310, 4294967295
    %vm313 = vcmask 58368
    %v314 = vsel %vm313, %v312, 2147483648
    %v315 = vand.u32 %v314, 65535
    %v316 = vshra.s32 %v314, 16
    %v317 = vcvt.s32.f32 %v315
    %v318 = vcvt.s32.f32 %v316
    %319 = vmax.xlane.f32.xlu0 %v318
    %v320 = vpop.xlane.xlu0 %319
    %vm321 = vcmp.eq.f32.partialorder %v318, %v320
    %v322 = vsel %vm321, %v317, -inf
    %323 = vmax.xlane.f32.xlu0 %v322
    %v324 = vpop.xlane.xlu0 %323
    %v325 = vcvt.f32.s32 %v324
    %v326 = vcvt.f32.s32 %v320
    %v327 = vshll.u32 %v326, 16
    %v328 = vadd.s32 %v327, %v325
    %vm329 = vcmp.lt.s32.totalorder %v328, 0
    %v330 = vsel %vm329, 7, %v328
    %vm331 = vcmp.eq.s32.totalorder %v310, %v330
    %v332 = vsel %vm331, %v307, 0.0
    %v333 = vsel %vm313, %v332, 0.0
    %334 = vadd.xlane.f32.xlu0 %v333
    %v335 = vpop.xlane.xlu0 %334
    %337 = vset.pattern.permute.xlu0 0
    %338 = vperm.xlu0 %337, %v307
    %v339 = vpop.permute.xlu0 %338
    %vm341 = vcmp.ge.f32.partialorder %v20, %v339
    %vm342 = vcmp.le.f32.partialorder %v20, %v335
    %vm343 = vmand %vm341, %vm342
    %v344 = vsel %vm343, 1, 0
    %v345 = vcvt.s32.f32 %v344
    %v348 = vrot.slane %v291, 7
    %vm349 = vcmask 1041409
    %v350 = vsel %vm349, %v348, %v290
    %v352 = vadd.f32 %v301, %v350
    %v353 = vmul.f32 %v306, 10.0
    %v354 = vadd.f32 %v352, %v353
    %v355 = vsel %vm343, %v354, 0.0
    %v356 = vld [vmem:[%s3] sm:$0xff]
    %v357 = vld [vmem:[%s3 + $0x8] sm:$0xff]
    %v359 = vsel %vm59, %v355, 0
    %361 = vmatpush.msra.mxu0 0.0
    %362 = vmatpush.msra.mxu0 0.0
    %363 = vmatpush.msra.mxu0 0.0
    %364 = vmatpush.msra.mxu0 0.0
    %365 = vmatpush.msra.mxu0 0.0
    %366 = vmatpush.msra.mxu0 0.0
    %367 = vmatpush.msra.mxu0 0.0
    %368 = vmatpush.msra.mxu0 0.0
    %369 = vmatpush.msra.mxu0 0.0
    %370 = vmatpush.msra.mxu0 0.0
    %371 = vmatpush.msra.mxu0 0.0
    %372 = vmatpush.msra.mxu0 0.0
    %373 = vmatpush.msra.mxu0 0.0
    %374 = vmatpush.msra.mxu0 0.0
    %375 = vmatpush.msra.mxu0 %v357
    %376 = vmatpush.msra.mxu0 %v356
    %377 = vmatmul.f32.gmra.mxu0 %v359
    %v378 = vpop.f32.mrf.mxu0
    %v379 = vadd.f32 0.0, %v378
    %380 = vdwg.mxu0
    %v381 = vmul.f32 %v379, %v345
    %v383 = vrot.slane %v381, 6
    %vm385 = vcmask 1041408
    %v386 = vsel %vm385, %v345, %v383
    %v387 = vsel %vm214, %v386, 0.0
    %388 = vadd.xlane.f32.xlu0 %v387
    %v389 = vpop.xlane.xlu0 %388
    %vm390 = vcmask 1024
    %v391 = vsel %vm390, %v389, 0.0
    %392 = vadd.xlane.f32.xlu0 %v391
    %v393 = vpop.xlane.xlu0 %392
    %v394 = vrot.slane %v393, 4
    %v395 = vadd.f32 %v393, %v394
    %v396 = vrot.slane %v395, 2
    %v397 = vadd.f32 %v395, %v396
    %v398 = vrot.slane %v397, 1
    %v399 = vadd.f32 %v397, %v398
    %s400 = vtos %v399
    %v402 = vrot.slane %v389, 2
    %v404 = vsel %vm390, %v402, 0.0
    %405 = vadd.xlane.f32.xlu0 %v404
    %v406 = vpop.xlane.xlu0 %405
    %v407 = vrot.slane %v406, 4
    %v408 = vadd.f32 %v406, %v407
    %v409 = vrot.slane %v408, 2
    %v410 = vadd.f32 %v408, %v409
    %v411 = vrot.slane %v410, 1
    %v412 = vadd.f32 %v410, %v411
    %s413 = vtos %v412
    %v414 = vstv %s400
    %v415 = vrcp.pop %v414
    %v416 = vmul.f32 %v414, %v415
    %v417 = vsub.f32 1.0, %v416
    %v418 = vmul.f32 %v415, %v417
    %v419 = vadd.f32 %v415, %v418
    %vm420 = vweird.f32 %v414
    %vm421 = vweird.f32 %v415
    %vm422 = vmor %vm420, %vm421
    %v423 = vsel %vm422, %v415, %v419
    %v424 = vand.u32 2147483647, %v414
    %vm425 = vcmp.eq.f32.partialorder %v424, 8.507059e+37
    %v426 = vand.u32 %v414, 2147483648
    %v427 = vor.u32 1.1754944e-38, %v426
    %v428 = vsel %vm425, %v427, %v423
    %s429 = vtos %v428
    %s430 = smul.f32 %s413, %s429
    %v431 = vstv %s430
    %v432 = vsub.f32 %v379, %v431
    %v433 = vmul.f32 %v432, %v432
    %v434 = vmul.f32 %v433, %v345
    %vm435 = vcmask 123904
    %v436 = vsel %vm435, %v434, 0.0
    %437 = vadd.xlane.f32.xlu0 %v436
    %v438 = vpop.xlane.xlu0 %437
    %v439 = vrot.slane %v438, 4
    %v440 = vadd.f32 %v438, %v439
    %v441 = vrot.slane %v440, 2
    %v442 = vadd.f32 %v440, %v441
    %v443 = vrot.slane %v442, 1
    %v444 = vadd.f32 %v442, %v443
    %s445 = vtos %v444
    %s446 = ssub.f32 %s400, 1.0
    %v447 = vstv %s446
    %v448 = vrcp.pop %v447
    %v449 = vmul.f32 %v447, %v448
    %v450 = vsub.f32 1.0, %v449
    %v451 = vmul.f32 %v448, %v450
    %v452 = vadd.f32 %v448, %v451
    %vm453 = vweird.f32 %v447
    %vm454 = vweird.f32 %v448
    %vm455 = vmor %vm453, %vm454
    %v456 = vsel %vm455, %v448, %v452
    %v457 = vand.u32 2147483647, %v447
    %vm458 = vcmp.eq.f32.partialorder %v457, 8.507059e+37
    %v459 = vand.u32 %v447, 2147483648
    %v460 = vor.u32 1.1754944e-38, %v459
    %v461 = vsel %vm458, %v460, %v456
    %s462 = vtos %v461
    %s463 = smul.f32 %s445, %s462
    %v464 = vstv %s463
    %v465 = vrsqrt.pop %v464
    %v466 = vmul.f32 %v465, %v464
    %v467 = vmul.f32 %v466, %v465
    %v468 = vmul.f32 0.5, %v467
    %v469 = vsub.f32 1.5, %v468
    %v470 = vmul.f32 %v465, %v469
    %v471 = vmul.f32 %v464, %v470
    %vm472 = vcmp.eq.f32.partialorder %v464, inf
    %v473 = vsel %vm472, %v464, %v471
    %vm474 = vcmp.eq.f32.partialorder %v464, 0.0
    %v475 = vand.u32 %v464, 2147483648
    %v476 = vsel %vm474, %v475, %v473
    %s477 = vtos %v476
    %s478 = sadd.f32 %s477, 1e-06
    %v479 = vstv %s478
    %v480 = vrcp.pop %v479
    %v481 = vmul.f32 %v479, %v480
    %v482 = vsub.f32 1.0, %v481
    %v483 = vmul.f32 %v480, %v482
    %v484 = vadd.f32 %v480, %v483
    %vm485 = vweird.f32 %v479
    %vm486 = vweird.f32 %v480
    %vm487 = vmor %vm485, %vm486
    %v488 = vsel %vm487, %v480, %v484
    %v489 = vand.u32 2147483647, %v479
    %vm490 = vcmp.eq.f32.partialorder %v489, 8.507059e+37
    %v491 = vand.u32 %v479, 2147483648
    %v492 = vor.u32 1.1754944e-38, %v491
    %v493 = vsel %vm490, %v492, %v488
    %v494 = vmul.f32 %v432, %v493
    %v495 = vsub.f32 %v494, %v21
    %v496 = vmul.f32 %v22, %v495
    %v497 = vmul.f32 %v496, %v345
    %vm498 = vweird.f32 %v497
    %vm499 = vmxor %vm498, 1
    %v500 = vsel %vm499, %v497, 0.0
    %v501 = vsub.f32 %v21, %v494
    %v502 = vmul.f32 %v501, %v501
    %v503 = vmul.f32 %v502, %v345
    %v505 = vrot.slane %v503, 6
    %v507 = vsel %vm385, %v500, %v505
    %v508 = vsel %vm214, %v507, 0.0
    %509 = vadd.xlane.f32.xlu0 %v508
    %v510 = vpop.xlane.xlu0 %509
    %v511 = vsel %vm390, %v510, 0.0
    %512 = vadd.xlane.f32.xlu0 %v511
    %v513 = vpop.xlane.xlu0 %512
    %v514 = vrot.slane %v513, 4
    %v515 = vadd.f32 %v513, %v514
    %v516 = vrot.slane %v515, 2
    %v517 = vadd.f32 %v515, %v516
    %v518 = vrot.slane %v517, 1
    %v519 = vadd.f32 %v517, %v518
    %s520 = vtos %v519
    %s521 = smul.f32 %s520, 0.03125
    %v523 = vrot.slane %v510, 2
    %v525 = vsel %vm390, %v523, 0.0
    %526 = vadd.xlane.f32.xlu0 %v525
    %v527 = vpop.xlane.xlu0 %526
    %v528 = vrot.slane %v527, 4
    %v529 = vadd.f32 %v527, %v528
    %v530 = vrot.slane %v529, 2
    %v531 = vadd.f32 %v529, %v530
    %v532 = vrot.slane %v531, 1
    %v533 = vadd.f32 %v531, %v532
    %s534 = vtos %v533
    %s535 = smul.f32 %s534, 0.03125
    %536 = vst [vmem:[#allocation3] sm:$0xff] 0.0
    %537 = vst.msk [vmem:[#allocation3] sm:$0x3] %vm435, %v350
    %538 = vst.msk [vmem:[#allocation3 + $0x2] sm:$0x3] %vm435, %v355
    %539 = vst.msk [vmem:[#allocation3 + $0x4] sm:$0x3] %vm435, %v345
    %vm540 = vcmp.eq.s32.totalorder %v310, 0
    %vm541 = vcmp.eq.s32.totalorder %v310, 1
    %v542 = vstv %s535
    %v543 = vsel %vm541, %v542, 0.0
    %v544 = vstv %s521
    %v545 = vsel %vm540, %v544, %v543
    %546 = vst [vmem:[#allocation3 + $0x6] sm:$0x1] %v545
    // Predicated region
    $region18: #{tpu_custom_call.1} parent=1 // pred_check
      _
    $region19: #{tpu_custom_call.1} parent=1 // pred_check_branch
      %548 = sbr.rel (0) target = $region21
    $region20: #{tpu_custom_call.1} parent=1 // pred_region
      %550 = vsyncadd [#allocation4], 0
      %s552 = sshll.u32 [#allocation3], 4
      %s553 = int_to_ptr.vmem [resolvable:$true] %s552
      %s554 = sshll.u32 %s4, 4
      %s555 = int_to_ptr.hbm [resolvable:$true] %s554
      %557 = dma.vmem_to_hbm [thread:$0]  %s553, 128, %s555, [#allocation4]
    $region21: #{tpu_custom_call.1} parent=1 // pred_fallthru
      _
    // Predicated region
    $region22: #{tpu_custom_call.1} parent=1 // pred_check
      _
    $region23: #{tpu_custom_call.1} parent=1 // pred_check_branch
      %559 = sbr.rel (0) target = $region25
    $region24: #{tpu_custom_call.1} parent=1 // pred_region
      %561 = dma.done [#allocation4], 128
    $region25: #{tpu_custom_call.1} parent=1 // pred_fallthru
      _
    %562 = vsyncpa [#allocation4], 1

</llo_original>
